<compile_context>
chip_gen: v5e
topology: v5e:2x2
jax: 0.10.0
libtpu: 0.0.40
codegen_flags: <defaults>
</compile_context>

<pallas_src>
import numpy as np
import jax
import jax.numpy as jnp
from jax import lax
from jax.experimental import pallas as pl
from jax.experimental.pallas import tpu as pltpu


def _round_up(x, n):
    return ((x + n - 1) // n) * n


# ----------------------------------------------------------------------------
# Pallas kernel:  out[p-tile] = sum_g  patches[g, p-tile] @ W'[g]   (+ b' once)
# grid = (P_tiles, m);  m (channel groups) is the reduction axis (last).
# ----------------------------------------------------------------------------
def rqconv_kernel(patch_ref, w_ref, b_ref, o_ref):
    u = pl.program_id(1)

    @pl.when(u == 0)
    def _():
        o_ref[...] = jnp.zeros_like(o_ref)

    # single fused conv + gather matmul on the MXU:
    #   [tp, Kp](bf16) @ [Kp, Cp](bf16) -> f32, accumulated directly in the
    #   lane-dense output block (no scratch accumulator).
    o_ref[...] += jnp.dot(patch_ref[0], w_ref[u],
                          preferred_element_type=jnp.float32)

    @pl.when(u == pl.num_programs(1) - 1)
    def _():
        o_ref[...] += b_ref[...]


def rqconv_matmul(patches, weights, bias, *, tp):
    """patches [m,P,Kp] (bf16), weights [m,Kp,Cp] (bf16), bias [1,Cp] (f32)."""
    m, P, kp = patches.shape
    cp = weights.shape[-1]

    p_pad = _round_up(P, tp)
    if p_pad != P:
        patches = jnp.pad(patches, ((0, 0), (0, p_pad - P), (0, 0)))

    # VMEM budget: double-buffered patch stream + resident weights/bias +
    # output blocks.  Cap at 64 MiB (v7x per-core VMEM).
    need = (2 * tp * kp * patches.dtype.itemsize        # patch double-buffer
            + 2 * m * kp * cp * weights.dtype.itemsize  # resident fused weights
            + 2 * tp * cp * 4                           # f32 output blocks
            + 2 * cp * 4)                               # bias
    vmem_limit = int(min(64 * 2 ** 20, max(32 * 2 ** 20, 2 * need)))

    out = pl.pallas_call(
        rqconv_kernel,
        out_shape=jax.ShapeDtypeStruct((p_pad, cp), jnp.float32),
        grid_spec=pltpu.PrefetchScalarGridSpec(
            num_scalar_prefetch=0,
            grid=(p_pad // tp, m),
            in_specs=[
                # patch stream: a new block every (p, u) grid step
                pl.BlockSpec((1, tp, kp), lambda p, u: (u, p, 0)),
                # fused weights: full array, constant index -> VMEM-resident
                pl.BlockSpec((m, kp, cp), lambda p, u: (0, 0, 0)),
                # fused bias: tiny, resident
                pl.BlockSpec((1, cp), lambda p, u: (0, 0)),
            ],
            out_specs=pl.BlockSpec((tp, cp), lambda p, u: (p, 0)),
        ),
        compiler_params=pltpu.CompilerParams(
            dimension_semantics=("parallel", "arbitrary"),
            vmem_limit_bytes=vmem_limit),
    )(patches, weights, bias)
    return out[:P]


# ----------------------------------------------------------------------------
# Glue: dimension split, im2col, parameter init / folding, full forward
# ----------------------------------------------------------------------------
def dimension_split(in_channels, m):
    return [round(i * in_channels / m) for i in range(m + 1)]


def _pick_tp(P, tp_max=512):
    """Largest row tile <= tp_max that still leaves >= 2 P-tiles (v7x megacore)."""
    tp = tp_max
    while tp > 128 and _round_up(P, tp) // tp < 2:
        tp //= 2
    return tp


def im2col(x, kh, kw, stride, padding, dilation):
    """x: [N, C, H, W] -> patches [N*OH*OW, C*kh*kw] (C-major, then kh, kw)."""
    n, c, h, w = x.shape
    xp = jnp.pad(x, ((0, 0), (0, 0), (padding, padding), (padding, padding)))
    hp, wp = h + 2 * padding, w + 2 * padding
    oh = (hp - dilation * (kh - 1) - 1) // stride + 1
    ow = (wp - dilation * (kw - 1) - 1) // stride + 1
    cols = []
    for i in range(kh):
        for j in range(kw):
            sl = xp[:, :,
                    i * dilation: i * dilation + stride * (oh - 1) + 1: stride,
                    j * dilation: j * dilation + stride * (ow - 1) + 1: stride]
            cols.append(sl)                              # [N, C, OH, OW]
    patches = jnp.stack(cols, axis=2)                    # [N, C, kh*kw, OH, OW]
    patches = patches.reshape(n, c, kh, kw, oh, ow)
    patches = patches.transpose(0, 4, 5, 1, 2, 3).reshape(n * oh * ow,
                                                          c * kh * kw)
    return patches, oh, ow


def init_rqconv_params(key, in_channels, out_channels, kernel_size,
                       depth, m, ks):
    """One (W, b, idx) triple per (depth, group) unit — matches KmeansConv."""
    ds = dimension_split(in_channels, m)
    units = []
    for d in range(depth):
        for i in range(m):
            cg = ds[i + 1] - ds[i]
            key, k1, k2, k3 = jax.random.split(key, 4)
            fan_in = cg * kernel_size * kernel_size
            bound = 1.0 / np.sqrt(fan_in)
            w = jax.random.uniform(k1, (ks, cg, kernel_size, kernel_size),
                                   jnp.float32, -bound, bound)
            b = jax.random.uniform(k2, (ks,), jnp.float32, -bound, bound)
            idx = jax.random.randint(k3, (out_channels,), 0, ks)
            units.append((w, b, idx))
    return ds, units


def rqconv_forward(x, ds, units, *, out_channels, kernel_size,
                   stride=1, padding=0, dilation=1, depth=1, m=1, ks=256,
                   compute_dtype=jnp.bfloat16):
    """RQConvLayer forward. x: [N, C_in, H, W] -> [N, C_out, OH, OW]."""
    # TODO(synk): groups > 1 in the inner Conv2d is not supported here.
    group_sizes = {ds[i + 1] - ds[i] for i in range(m)}
    assert len(group_sizes) == 1, "equal channel splits required for stacking"
    cg = ds[1] - ds[0]

    n = x.shape[0]
    k_raw = cg * kernel_size * kernel_size
    k_pad = _round_up(k_raw, 128)            # lane-dense K for MXU / DMA
    c_pad = _round_up(out_channels, 128)     # lane-dense output stores

    # im2col per channel group (identical for every depth -> done once,
    # no depth-wise duplication of the patch stream).
    group_patches = []
    for i in range(m):
        p, oh, ow = im2col(x[:, ds[i]:ds[i + 1]], kernel_size, kernel_size,
                           stride, padding, dilation)
        group_patches.append(p)
    patches = jnp.stack(group_patches, axis=0)                    # [m, P, K]
    if k_pad != k_raw:
        patches = jnp.pad(patches, ((0, 0), (0, 0), (0, k_pad - k_raw)))
    patches = patches.astype(compute_dtype)

    # Fold the one-hot gather and the bias into the weights, and sum over
    # depth (exact: the patches are identical across depth).
    w_fused = jnp.zeros((m, k_raw, out_channels), jnp.float32)
    b_fused = jnp.zeros((out_channels,), jnp.float32)
    for d in range(depth):
        for i in range(m):
            w, b, idx = units[d * m + i]
            g = jax.nn.one_hot(idx, ks, dtype=jnp.float32).T      # [ks, C_out]
            w_fused = w_fused.at[i].add(w.reshape(ks, k_raw).T @ g)  # [K, C_out]
            b_fused = b_fused + b @ g                                # [C_out]
    w_fused = jnp.pad(w_fused, ((0, 0), (0, k_pad - k_raw),
                                (0, c_pad - out_channels))).astype(compute_dtype)
    b_fused = jnp.pad(b_fused, (0, c_pad - out_channels)).reshape(1, c_pad)

    tp = _pick_tp(n * oh * ow)
    out_flat = rqconv_matmul(patches, w_fused, b_fused, tp=tp)    # [P, Cp]
    out = out_flat[:, :out_channels].reshape(n, oh, ow, out_channels)
    return out.transpose(0, 3, 1, 2)                              # NCHW


# ----------------------------------------------------------------------------
# Pure-JAX reference (mirrors the PyTorch module) for a correctness check
# ----------------------------------------------------------------------------
def rqconv_reference(x, ds, units, *, stride, padding, dilation, depth, m):
    total = None
    for d in range(depth):
        for i in range(m):
            w, b, idx = units[d * m + i]
            xs = x[:, ds[i]:ds[i + 1]]
            y = lax.conv_general_dilated(
                xs, w, (stride, stride), [(padding, padding)] * 2,
                rhs_dilation=(dilation, dilation),
                dimension_numbers=("NCHW", "OIHW", "NCHW"))
            y = y + b[None, :, None, None]
            y = y[:, idx]                       # torch.index_select(dim=1)
            total = y if total is None else total + y
    return total


if __name__ == "__main__":
    # Small config consistent with RQConvLayer(in, out, k, padding=1,
    # depth=2, m=2, ks=16)
    N, C_IN, H, W = 2, 4, 16, 16
    C_OUT, KSZ = 8, 3
    STRIDE, PAD, DIL = 1, 1, 1
    DEPTH, M, KS = 2, 2, 16

    key = jax.random.PRNGKey(0)
    kx, kp = jax.random.split(key)
    x = jax.random.normal(kx, (N, C_IN, H, W), jnp.float32)

    ds, units = init_rqconv_params(kp, C_IN, C_OUT, KSZ, DEPTH, M, KS)

    out = rqconv_forward(x, ds, units, out_channels=C_OUT, kernel_size=KSZ,
                         stride=STRIDE, padding=PAD, dilation=DIL,
                         depth=DEPTH, m=M, ks=KS)
    out = jax.block_until_ready(out)

    ref = rqconv_reference(x, ds, units, stride=STRIDE, padding=PAD,
                           dilation=DIL, depth=DEPTH, m=M)
    ref = jax.block_until_ready(ref)

    assert out.shape == (N, C_OUT, (H + 2 * PAD - KSZ) // STRIDE + 1,
                         (W + 2 * PAD - KSZ) // STRIDE + 1), out.shape
    np.testing.assert_allclose(np.asarray(out), np.asarray(ref),
                               rtol=5e-2, atol=5e-2)
    print("KERNEL_OK")
</pallas_src>

<mosaic_0001>
module attributes {stable_mosaic.version = 11 : i64} {
  func.func @rqconv_kernel(%arg0: i32, %arg1: i32, %arg2: memref<1x256x128xbf16, #tpu.memory_space<vmem>>, %arg3: memref<2x128x128xbf16, #tpu.memory_space<vmem>>, %arg4: memref<1x128xf32, #tpu.memory_space<vmem>>, %arg5: memref<256x128xf32, #tpu.memory_space<vmem>>) attributes {dimension_semantics = [#tpu.dimension_semantics<parallel>, #tpu.dimension_semantics<arbitrary>], iteration_bounds = array<i64: 2, 2>, scalar_prefetch = 0 : i64, scratch_operands = 0 : i64, tpu.core_type = #tpu.core_type<tc>, window_params = [{transform_indices = @transform_0, window_bounds = array<i64: 1, 256, 128>}, {pipeline_mode = #tpu.pipeline_mode<synchronous>, transform_indices = @transform_1, window_bounds = array<i64: 2, 128, 128>}, {pipeline_mode = #tpu.pipeline_mode<synchronous>, transform_indices = @transform_2, window_bounds = array<i64: 1, 128>}, {transform_indices = @transform_3, window_bounds = array<i64: 256, 128>}]} {
    %c0_i32 = arith.constant 0 : i32
    %0 = arith.cmpi eq, %arg1, %c0_i32 : i32
    %1 = arith.extui %0 : i1 to i32
    %c0_i32_0 = arith.constant 0 : i32
    %2 = arith.cmpi ne, %1, %c0_i32_0 : i32
    scf.if %2 {
      %cst_10 = arith.constant 0.000000e+00 : f32
      %15 = vector.broadcast %cst_10 : f32 to vector<256x128xf32>
      %c0_11 = arith.constant 0 : index
      %c0_12 = arith.constant 0 : index
      %16 = vector.load %arg5[%c0_11, %c0_12] : memref<256x128xf32, #tpu.memory_space<vmem>>, vector<256x128xf32>
      tpu.vector_store %arg5[%c0_11, %c0_12], %15 {strides = array<i32>} : memref<256x128xf32, #tpu.memory_space<vmem>>, vector<256x128xf32>,
    } else {
    }
    %c0 = arith.constant 0 : index
    %c0_1 = arith.constant 0 : index
    %3 = vector.load %arg5[%c0, %c0_1] : memref<256x128xf32, #tpu.memory_space<vmem>>, vector<256x128xf32>
    %c0_2 = arith.constant 0 : index
    %c0_3 = arith.constant 0 : index
    %c0_4 = arith.constant 0 : index
    %4 = vector.load %arg2[%c0_2, %c0_3, %c0_4] : memref<1x256x128xbf16, #tpu.memory_space<vmem>>, vector<1x256x128xbf16>
    %5 = vector.shape_cast %4 : vector<1x256x128xbf16> to vector<256x128xbf16>
    %6 = arith.index_cast %arg1 : i32 to index
    %c0_5 = arith.constant 0 : index
    %c0_6 = arith.constant 0 : index
    %7 = vector.load %arg3[%6, %c0_5, %c0_6] : memref<2x128x128xbf16, #tpu.memory_space<vmem>>, vector<1x128x128xbf16>
    %8 = vector.shape_cast %7 : vector<1x128x128xbf16> to vector<128x128xbf16>
    %cst = arith.constant dense<0.000000e+00> : vector<256x128xf32>
    %9 = tpu.matmul %5, %8, %cst {dimension_numbers = #tpu.dot_dimension_numbers<[1], [0], [0], [1], [0, 0, 1, 1], [], []>} : vector<256x128xbf16>, vector<128x128xbf16>, vector<256x128xf32> -> vector<256x128xf32>
    %10 = arith.addf %3, %9 : vector<256x128xf32>
    %c0_7 = arith.constant 0 : index
    %c0_8 = arith.constant 0 : index
    %11 = vector.load %arg5[%c0_7, %c0_8] : memref<256x128xf32, #tpu.memory_space<vmem>>, vector<256x128xf32>
    tpu.vector_store %arg5[%c0_7, %c0_8], %10 {strides = array<i32>} : memref<256x128xf32, #tpu.memory_space<vmem>>, vector<256x128xf32>,
    %c1_i32 = arith.constant 1 : i32
    %12 = arith.cmpi eq, %arg1, %c1_i32 : i32
    %13 = arith.extui %12 : i1 to i32
    %c0_i32_9 = arith.constant 0 : i32
    %14 = arith.cmpi ne, %13, %c0_i32_9 : i32
    scf.if %14 {
      %c0_10 = arith.constant 0 : index
      %c0_11 = arith.constant 0 : index
      %15 = vector.load %arg5[%c0_10, %c0_11] : memref<256x128xf32, #tpu.memory_space<vmem>>, vector<256x128xf32>
      %c0_12 = arith.constant 0 : index
      %c0_13 = arith.constant 0 : index
      %16 = vector.load %arg4[%c0_12, %c0_13] : memref<1x128xf32, #tpu.memory_space<vmem>>, vector<1x128xf32>
      %17 = vector.broadcast %16 : vector<1x128xf32> to vector<256x128xf32>
      %18 = arith.addf %15, %17 : vector<256x128xf32>
      %c0_14 = arith.constant 0 : index
      %c0_15 = arith.constant 0 : index
      %19 = vector.load %arg5[%c0_14, %c0_15] : memref<256x128xf32, #tpu.memory_space<vmem>>, vector<256x128xf32>
      tpu.vector_store %arg5[%c0_14, %c0_15], %18 {strides = array<i32>} : memref<256x128xf32, #tpu.memory_space<vmem>>, vector<256x128xf32>,
    } else {
    }
    return
  }
  func.func @transform_0(%arg0: i32, %arg1: i32) -> (i32, i32, i32) {
    %c0_i32 = arith.constant 0 : i32
    %c0_i32_0 = arith.constant 0 : i32
    return %arg1, %arg0, %c0_i32 : i32, i32, i32
  }
  func.func @transform_1(%arg0: i32, %arg1: i32) -> (i32, i32, i32) {
    %c0_i32 = arith.constant 0 : i32
    %c0_i32_0 = arith.constant 0 : i32
    %c0_i32_1 = arith.constant 0 : i32
    %c0_i32_2 = arith.constant 0 : i32
    return %c0_i32, %c0_i32_0, %c0_i32_1 : i32, i32, i32
  }
  func.func @transform_2(%arg0: i32, %arg1: i32) -> (i32, i32) {
    %c0_i32 = arith.constant 0 : i32
    %c0_i32_0 = arith.constant 0 : i32
    %c0_i32_1 = arith.constant 0 : i32
    return %c0_i32, %c0_i32_0 : i32, i32
  }
  func.func @transform_3(%arg0: i32, %arg1: i32) -> (i32, i32) {
    %c0_i32 = arith.constant 0 : i32
    %c0_i32_0 = arith.constant 0 : i32
    return %arg0, %c0_i32 : i32, i32
  }
}

</mosaic_0001>

<llo_original>
// kernel: tpu_custom_call.1
$region0: #{tpu_custom_call.1}
  #allocation0 [shape = 'u32[]', space=smem, size = 0x4, offset = 0x4, fixed_abs, tag = 'smem constant byte address 0x4 - core index']
  #allocation1 [shape = 'u32[72,128]{1,0:T(1,128)}', space=vmem, size = 0x9000, scoped, tag = 'internal scratch']
  %s0 = inlined_call_operand.hbm [shape: bf16[2,512,128], index: 0, kind: input, shape index: {}]
  %s1 = inlined_call_operand.hbm [shape: bf16[2,128,128], index: 1, kind: input, shape index: {}]
  %s2 = inlined_call_operand.vmem [shape: f32[1,128], index: 2, kind: input, shape index: {}]
  %s3 = inlined_call_operand.hbm [shape: f32[512,128], index: 3, kind: output, shape index: {}]
  %s4 = sld [smem:[#allocation0]]
  $region61: #{tpu_custom_call.1} parent=0
    _
  %s6 = ssub.s32 1, %s4
  %s7 = scalar_select 0, %s6, %s4
  $region1: #{tpu_custom_call.1} parent=0
    #allocation2 [shape = 'u8[131072]{0}', space=vmem, size = 0x20000, scoped, tag = 'input window, operand 0']
    #allocation3 [shape = 's32[2]{0}', space=sflag, size = 0x8, scoped, tag = 'scoped memory for tpu_custom_call.1']
    #allocation4 [shape = 's32[2]{0}', space=sflag, size = 0x8, scoped, tag = 'scoped memory for tpu_custom_call.1']
    #allocation5 [shape = 'u8[65536]{0}', space=vmem, size = 0x10000, scoped, tag = 'input window, operand 1, single buffered']
    #allocation6 [shape = 's32[1]{0}', space=sflag, size = 0x4, scoped, tag = 'scoped memory for tpu_custom_call.1']
    #allocation7 [shape = 'u8[262144]{0}', space=vmem, size = 0x40000, scoped, tag = 'output window, operand 0']
    %8 = vsyncpa [#allocation3], 0
    %s9 = scalar_lea.sflag [#allocation3], 1
    %10 = vsyncpa %s9, 0
    %11 = vsyncpa [#allocation6], 0
    %12 = vsyncpa [#allocation4], 0
    %s13 = scalar_lea.sflag [#allocation4], 1
    %14 = vsyncpa %s13, 0
    loop: start=0, step=1, limit=6
    $region2: #{tpu_custom_call.1} parent=1 // loop_pre_header
      _
    $region3: #{tpu_custom_call.1} parent=1 // loop_header
      %s16 = sphi 0, %s20
      %p17 = scmp.ge.s32.totalorder %s16, 6
      %s23 = sphi 0, %s35
      %s24 = sphi 0, %s31
      %s25 = sphi 0, %s23
      %s26 = sphi 0, %s24
      %s27 = sphi 0, %s25
      %s28 = sphi 0, %s26
      %s40 = sphi 0, %s42
      %s43 = sphi 0, %s40
      %s44 = sphi 0, %s43
      %s60 = sphi 0, %s44
      %s64 = sphi 0, %s64
      %s66 = sphi 0, %s64
      %s67 = sphi 0, %s66
      %s81 = sphi 0, %s67
      %s85 = sphi 0, %s85
      %s87 = sphi 0, %s85
      %s88 = sphi 0, %s87
      %s102 = sphi 0, %s88
      %s108 = sphi 0, %s110
      %s111 = sphi 0, %s108
      %s112 = sphi 0, %s111
      %s128 = sphi 0, %s112
    $region4: #{tpu_custom_call.1} parent=1 // loop_header_branch
      %19 = sbr.rel (%p17) target = $region8
    $region5: #{tpu_custom_call.1} parent=1 // loop_body
      %s21 = ssub.s32 %s16, 1
      %s22 = ssub.s32 %s16, 2
      %s29 = sadd.s32 1, %s24
      %p30 = scmp.ge.s32.totalorder %s29, 2
      %s31 = scalar_select %p30, 0, %s29
      %s32 = sadd.s32 1, %s23
      %s33 = scalar_select %p30, %s32, %s23
      %p34 = scmp.ge.s32.totalorder %s33, 2
      %s35 = scalar_select %p34, 0, %s33
      %s36 = ssub.s32 %s24, %s31
      %s37 = ssub.s32 %s23, %s35
      %s38 = sor.u32 %s36, %s37
      %p39 = scmp.eq.s32.totalorder %s38, 0
      %s41 = sadd.s32 %s40, 1
      %s42 = scalar_select %p39, %s40, %s41
      %p45 = pneg %p39
      %p46 = scmp.eq.s32.totalorder %s16, 3
      %p47 = por %p45, %p46
      %p48 = scmp.ne.s32.totalorder %s40, %s43
      %p49 = scmp.eq.s32.totalorder %s16, 0
      %p50 = por %p48, %p49
      %p51 = scmp.ne.s32.totalorder %s40, %s43
      %p52 = scmp.eq.s32.totalorder %s21, 3
      %p53 = por %p51, %p52
      %p54 = scmp.ne.s32.totalorder %s43, %s44
      %p55 = scmp.eq.s32.totalorder %s21, 0
      %p56 = por %p54, %p55
      %p57 = scmp.ne.s32.totalorder %s43, %s44
      %p58 = scmp.eq.s32.totalorder %s22, 3
      %p59 = por %p57, %p58
      %p61 = scmp.ne.s32.totalorder %s44, %s60
      %p62 = scmp.eq.s32.totalorder %s22, 0
      %p63 = por %p61, %p62
      %s65 = sadd.s32 %s64, 1
      %p68 = scmp.eq.s32.totalorder %s16, 3
      %p69 = scmp.ne.s32.totalorder %s64, %s66
      %p70 = scmp.eq.s32.totalorder %s16, 0
      %p71 = por %p69, %p70
      %p72 = scmp.ne.s32.totalorder %s64, %s66
      %p73 = scmp.eq.s32.totalorder %s21, 3
      %p74 = por %p72, %p73
      %p75 = scmp.ne.s32.totalorder %s66, %s67
      %p76 = scmp.eq.s32.totalorder %s21, 0
      %p77 = por %p75, %p76
      %p78 = scmp.ne.s32.totalorder %s66, %s67
      %p79 = scmp.eq.s32.totalorder %s22, 3
      %p80 = por %p78, %p79
      %p82 = scmp.ne.s32.totalorder %s67, %s81
      %p83 = scmp.eq.s32.totalorder %s22, 0
      %p84 = por %p82, %p83
      %s86 = sadd.s32 %s85, 1
      %p89 = scmp.eq.s32.totalorder %s16, 3
      %p90 = scmp.ne.s32.totalorder %s85, %s87
      %p91 = scmp.eq.s32.totalorder %s16, 0
      %p92 = por %p90, %p91
      %p93 = scmp.ne.s32.totalorder %s85, %s87
      %p94 = scmp.eq.s32.totalorder %s21, 3
      %p95 = por %p93, %p94
      %p96 = scmp.ne.s32.totalorder %s87, %s88
      %p97 = scmp.eq.s32.totalorder %s21, 0
      %p98 = por %p96, %p97
      %p99 = scmp.ne.s32.totalorder %s87, %s88
      %p100 = scmp.eq.s32.totalorder %s22, 3
      %p101 = por %p99, %p100
      %p103 = scmp.ne.s32.totalorder %s88, %s102
      %p104 = scmp.eq.s32.totalorder %s22, 0
      %p105 = por %p103, %p104
      %s106 = ssub.s32 %s23, %s35
      %p107 = scmp.eq.s32.totalorder %s106, 0
      %s109 = sadd.s32 %s108, 1
      %s110 = scalar_select %p107, %s108, %s109
      %p113 = pneg %p107
      %p114 = scmp.eq.s32.totalorder %s16, 3
      %p115 = por %p113, %p114
      %p116 = scmp.ne.s32.totalorder %s108, %s111
      %p117 = scmp.eq.s32.totalorder %s16, 0
      %p118 = por %p116, %p117
      %p119 = scmp.ne.s32.totalorder %s108, %s111
      %p120 = scmp.eq.s32.totalorder %s21, 3
      %p121 = por %p119, %p120
      %p122 = scmp.ne.s32.totalorder %s111, %s112
      %p123 = scmp.eq.s32.totalorder %s21, 0
      %p124 = por %p122, %p123
      %p125 = scmp.ne.s32.totalorder %s111, %s112
      %p126 = scmp.eq.s32.totalorder %s22, 3
      %p127 = por %p125, %p126
      %p129 = scmp.ne.s32.totalorder %s112, %s128
      %p130 = scmp.eq.s32.totalorder %s22, 0
      %p131 = por %p129, %p130
      %p132 = scmp.le.s32.totalorder 1, %s16
      %p133 = scmp.lt.s32.totalorder %s16, 5
      %p134 = pnand %p132, %p133
      %p135 = pneg %p134
      // Predicated region
      $region9: #{tpu_custom_call.1} parent=5 // pred_check
        _
      $region10: #{tpu_custom_call.1} parent=5 // pred_check_branch
        %137 = sbr.rel (%p134) target = $region12
      $region11: #{tpu_custom_call.1} parent=5 // pred_region
        %s138 = ssub.s32 %s16, 1
        // Predicated region
        $region13: #{tpu_custom_call.1} parent=11 // pred_check
          %p139 = pneg %p77
        $region14: #{tpu_custom_call.1} parent=11 // pred_check_branch
          %141 = sbr.rel (%p139) target = $region16
        $region15: #{tpu_custom_call.1} parent=11 // pred_region
          %143 = vsyncadd [#allocation6], 0
          %s144 = sshll.u32 %s1, 4
          %s145 = int_to_ptr.hbm [resolvable:$true] %s144
          %s146 = sshll.u32 [#allocation5], 4
          %s147 = int_to_ptr.vmem [resolvable:$true] %s146
          %152 = dma.hbm_to_vmem [thread:$0]  %s145, 2048, %s147, [#allocation6], 64, 64, 4
        $region16: #{tpu_custom_call.1} parent=11 // pred_fallthru
          _
        // Predicated region
        $region17: #{tpu_custom_call.1} parent=11 // pred_check
          %p153 = pneg %p98
        $region18: #{tpu_custom_call.1} parent=11 // pred_check_branch
          %155 = sbr.rel (%p153) target = $region20
        $region19: #{tpu_custom_call.1} parent=11 // pred_region
          _
        $region20: #{tpu_custom_call.1} parent=11 // pred_fallthru
          _
      $region12: #{tpu_custom_call.1} parent=5 // pred_fallthru
        _
      %p156 = scmp.lt.s32.totalorder %s16, 4
      // Predicated region
      $region21: #{tpu_custom_call.1} parent=5 // pred_check
        %p157 = pneg %p156
      $region22: #{tpu_custom_call.1} parent=5 // pred_check_branch
        %159 = sbr.rel (%p157) target = $region24
      $region23: #{tpu_custom_call.1} parent=5 // pred_region
        // Predicated region
        $region25: #{tpu_custom_call.1} parent=23 // pred_check
          %p160 = pneg %p50
        $region26: #{tpu_custom_call.1} parent=23 // pred_check_branch
          %162 = sbr.rel (%p160) target = $region28
        $region27: #{tpu_custom_call.1} parent=23 // pred_region
          %s163 = sand.u32 %s40, 1
          %s164 = scalar_lea.sflag [#allocation3], %s163
          %s165 = sand.u32 %s40, 1
          %s166 = smul.addr %s165, 128
          %s167 = scalar_lea.vmem [#allocation2], %s166
          %s168 = smul.u32 32, %s23
          %170 = vsyncadd %s164, 0
          %s171 = smul.addr %s24, 64
          %s172 = sadd.s32 %s168, %s171
          %s173 = smul.addr %s172, 4
          %s174 = scalar_lea.hbm %s0, %s173
          %s175 = sshll.u32 %s174, 4
          %s176 = int_to_ptr.hbm [resolvable:$true] %s175
          %s177 = sshll.u32 %s167, 4
          %s178 = int_to_ptr.vmem [resolvable:$true] %s177
          %183 = dma.hbm_to_vmem [thread:$0]  %s176, 2048, %s178, %s164, 64, 64, 4
        $region28: #{tpu_custom_call.1} parent=23 // pred_fallthru
          _
      $region24: #{tpu_custom_call.1} parent=5 // pred_fallthru
        _
      %p184 = scmp.le.s32.totalorder 1, %s16
      %p185 = scmp.lt.s32.totalorder %s16, 5
      %p186 = pnand %p184, %p185
      %p187 = pneg %p186
      // Predicated region
      $region29: #{tpu_custom_call.1} parent=5 // pred_check
        _
      $region30: #{tpu_custom_call.1} parent=5 // pred_check_branch
        %189 = sbr.rel (%p186) target = $region32
      $region31: #{tpu_custom_call.1} parent=5 // pred_region
        %s190 = ssub.s32 %s16, 1
        %s191 = sand.u32 %s43, 1
        %s192 = scalar_lea.sflag [#allocation3], %s191
        %s193 = sand.u32 %s43, 1
        %s194 = smul.addr %s193, 128
        %s195 = scalar_lea.vmem [#allocation2], %s194
        // Predicated region
        $region33: #{tpu_custom_call.1} parent=31 // pred_check
          %p196 = pneg %p56
        $region34: #{tpu_custom_call.1} parent=31 // pred_check_branch
          %198 = sbr.rel (%p196) target = $region36
        $region35: #{tpu_custom_call.1} parent=31 // pred_region
          %200 = dma.done %s192, 2048
        $region36: #{tpu_custom_call.1} parent=31 // pred_fallthru
          _
        // Predicated region
        $region37: #{tpu_custom_call.1} parent=31 // pred_check
          %p201 = pneg %p77
        $region38: #{tpu_custom_call.1} parent=31 // pred_check_branch
          %203 = sbr.rel (%p201) target = $region40
        $region39: #{tpu_custom_call.1} parent=31 // pred_region
          %205 = dma.done [#allocation6], 2048
        $region40: #{tpu_custom_call.1} parent=31 // pred_fallthru
          _
        %s206 = sand.u32 %s43, 1
        %s207 = scalar_lea.sflag [#allocation3], %s206
        %s208 = sand.u32 %s43, 1
        %s209 = smul.addr %s208, 128
        %s210 = scalar_lea.vmem [#allocation2], %s209
        %p211 = pneg %p56
        %p212 = pneg %p53
        %p213 = pneg %p77
        %p214 = pneg %p74
        %p215 = pneg %p98
        %p216 = pneg %p95
        %p217 = pneg %p124
        %p218 = pneg %p121
        %s219 = sand.u32 %s111, 1
        %s220 = scalar_lea.sflag [#allocation4], %s219
        %s221 = sand.u32 %s111, 1
        %s222 = smul.addr %s221, 256
        %s223 = scalar_lea.vmem [#allocation7], %s222
        %s224 = smul.u32 32, %s25
        %s225 = smul.u32 32, %s25
        %p226 = scmp.eq.s32.totalorder %s26, 0
        // Predicated region
        $region41: #{tpu_custom_call.1} parent=31 // pred_check
          %p227 = pneg %p226
        $region42: #{tpu_custom_call.1} parent=31 // pred_check_branch
          %229 = sbr.rel (%p227) target = $region44
        $region43: #{tpu_custom_call.1} parent=31 // pred_region
          %230 = vst [vmem:[%s223] sm:$0xff] 0.0
          %231 = vst [vmem:[%s223 + $0x8] sm:$0xff] 0.0
          %232 = vst [vmem:[%s223 + $0x10] sm:$0xff] 0.0
          %233 = vst [vmem:[%s223 + $0x18] sm:$0xff] 0.0
          %234 = vst [vmem:[%s223 + $0x20] sm:$0xff] 0.0
          %235 = vst [vmem:[%s223 + $0x28] sm:$0xff] 0.0
          %236 = vst [vmem:[%s223 + $0x30] sm:$0xff] 0.0
          %237 = vst [vmem:[%s223 + $0x38] sm:$0xff] 0.0
          %238 = vst [vmem:[%s223 + $0x40] sm:$0xff] 0.0
          %239 = vst [vmem:[%s223 + $0x48] sm:$0xff] 0.0
          %240 = vst [vmem:[%s223 + $0x50] sm:$0xff] 0.0
          %241 = vst [vmem:[%s223 + $0x58] sm:$0xff] 0.0
          %242 = vst [vmem:[%s223 + $0x60] sm:$0xff] 0.0
          %243 = vst [vmem:[%s223 + $0x68] sm:$0xff] 0.0
          %244 = vst [vmem:[%s223 + $0x70] sm:$0xff] 0.0
          %245 = vst [vmem:[%s223 + $0x78] sm:$0xff] 0.0
          %246 = vst [vmem:[%s223 + $0x80] sm:$0xff] 0.0
          %247 = vst [vmem:[%s223 + $0x88] sm:$0xff] 0.0
          %248 = vst [vmem:[%s223 + $0x90] sm:$0xff] 0.0
          %249 = vst [vmem:[%s223 + $0x98] sm:$0xff] 0.0
          %250 = vst [vmem:[%s223 + $0xa0] sm:$0xff] 0.0
          %251 = vst [vmem:[%s223 + $0xa8] sm:$0xff] 0.0
          %252 = vst [vmem:[%s223 + $0xb0] sm:$0xff] 0.0
          %253 = vst [vmem:[%s223 + $0xb8] sm:$0xff] 0.0
          %254 = vst [vmem:[%s223 + $0xc0] sm:$0xff] 0.0
          %255 = vst [vmem:[%s223 + $0xc8] sm:$0xff] 0.0
          %256 = vst [vmem:[%s223 + $0xd0] sm:$0xff] 0.0
          %257 = vst [vmem:[%s223 + $0xd8] sm:$0xff] 0.0
          %258 = vst [vmem:[%s223 + $0xe0] sm:$0xff] 0.0
          %259 = vst [vmem:[%s223 + $0xe8] sm:$0xff] 0.0
          %260 = vst [vmem:[%s223 + $0xf0] sm:$0xff] 0.0
          %261 = vst [vmem:[%s223 + $0xf8] sm:$0xff] 0.0
        $region44: #{tpu_custom_call.1} parent=31 // pred_fallthru
          _
        %v262 = vld [vmem:[%s223] sm:$0xff]
        %v263 = vld [vmem:[%s223 + $0x8] sm:$0xff]
        %v264 = vld [vmem:[%s223 + $0x10] sm:$0xff]
        %v265 = vld [vmem:[%s223 + $0x18] sm:$0xff]
        %v266 = vld [vmem:[%s223 + $0x20] sm:$0xff]
        %v267 = vld [vmem:[%s223 + $0x28] sm:$0xff]
        %v268 = vld [vmem:[%s223 + $0x30] sm:$0xff]
        %v269 = vld [vmem:[%s223 + $0x38] sm:$0xff]
        %v270 = vld [vmem:[%s223 + $0x40] sm:$0xff]
        %v271 = vld [vmem:[%s223 + $0x48] sm:$0xff]
        %v272 = vld [vmem:[%s223 + $0x50] sm:$0xff]
        %v273 = vld [vmem:[%s223 + $0x58] sm:$0xff]
        %v274 = vld [vmem:[%s223 + $0x60] sm:$0xff]
        %v275 = vld [vmem:[%s223 + $0x68] sm:$0xff]
        %v276 = vld [vmem:[%s223 + $0x70] sm:$0xff]
        %v277 = vld [vmem:[%s223 + $0x78] sm:$0xff]
        %v278 = vld [vmem:[%s223 + $0x80] sm:$0xff]
        %v279 = vld [vmem:[%s223 + $0x88] sm:$0xff]
        %v280 = vld [vmem:[%s223 + $0x90] sm:$0xff]
        %v281 = vld [vmem:[%s223 + $0x98] sm:$0xff]
        %v282 = vld [vmem:[%s223 + $0xa0] sm:$0xff]
        %v283 = vld [vmem:[%s223 + $0xa8] sm:$0xff]
        %v284 = vld [vmem:[%s223 + $0xb0] sm:$0xff]
        %v285 = vld [vmem:[%s223 + $0xb8] sm:$0xff]
        %v286 = vld [vmem:[%s223 + $0xc0] sm:$0xff]
        %v287 = vld [vmem:[%s223 + $0xc8] sm:$0xff]
        %v288 = vld [vmem:[%s223 + $0xd0] sm:$0xff]
        %v289 = vld [vmem:[%s223 + $0xd8] sm:$0xff]
        %v290 = vld [vmem:[%s223 + $0xe0] sm:$0xff]
        %v291 = vld [vmem:[%s223 + $0xe8] sm:$0xff]
        %v292 = vld [vmem:[%s223 + $0xf0] sm:$0xff]
        %v293 = vld [vmem:[%s223 + $0xf8] sm:$0xff]
        %v294 = vld [vmem:[%s195] sm:$0xf]
        %v295 = vld [vmem:[%s195 + $0x4] sm:$0xf]
        %v296 = vld [vmem:[%s195 + $0x8] sm:$0xf]
        %v297 = vld [vmem:[%s195 + $0xc] sm:$0xf]
        %v298 = vld [vmem:[%s195 + $0x10] sm:$0xf]
        %v299 = vld [vmem:[%s195 + $0x14] sm:$0xf]
        %v300 = vld [vmem:[%s195 + $0x18] sm:$0xf]
        %v301 = vld [vmem:[%s195 + $0x1c] sm:$0xf]
        %v302 = vld [vmem:[%s195 + $0x20] sm:$0xf]
        %v303 = vld [vmem:[%s195 + $0x24] sm:$0xf]
        %v304 = vld [vmem:[%s195 + $0x28] sm:$0xf]
        %v305 = vld [vmem:[%s195 + $0x2c] sm:$0xf]
        %v306 = vld [vmem:[%s195 + $0x30] sm:$0xf]
        %v307 = vld [vmem:[%s195 + $0x34] sm:$0xf]
        %v308 = vld [vmem:[%s195 + $0x38] sm:$0xf]
        %v309 = vld [vmem:[%s195 + $0x3c] sm:$0xf]
        %v310 = vld [vmem:[%s195 + $0x40] sm:$0xf]
        %v311 = vld [vmem:[%s195 + $0x44] sm:$0xf]
        %v312 = vld [vmem:[%s195 + $0x48] sm:$0xf]
        %v313 = vld [vmem:[%s195 + $0x4c] sm:$0xf]
        %v314 = vld [vmem:[%s195 + $0x50] sm:$0xf]
        %v315 = vld [vmem:[%s195 + $0x54] sm:$0xf]
        %v316 = vld [vmem:[%s195 + $0x58] sm:$0xf]
        %v317 = vld [vmem:[%s195 + $0x5c] sm:$0xf]
        %v318 = vld [vmem:[%s195 + $0x60] sm:$0xf]
        %v319 = vld [vmem:[%s195 + $0x64] sm:$0xf]
        %v320 = vld [vmem:[%s195 + $0x68] sm:$0xf]
        %v321 = vld [vmem:[%s195 + $0x6c] sm:$0xf]
        %v322 = vld [vmem:[%s195 + $0x70] sm:$0xf]
        %v323 = vld [vmem:[%s195 + $0x74] sm:$0xf]
        %v324 = vld [vmem:[%s195 + $0x78] sm:$0xf]
        %v325 = vld [vmem:[%s195 + $0x7c] sm:$0xf]
        %s326 = smul.u32 %s26, 16
        %s327 = smul.addr %s326, 4
        %s328 = scalar_lea.vmem [#allocation5], %s327
        %v329 = vld [vmem:[%s328] sm:$0xf]
        %v330 = vld [vmem:[%s328 + $0x4] sm:$0xf]
        %v331 = vld [vmem:[%s328 + $0x8] sm:$0xf]
        %v332 = vld [vmem:[%s328 + $0xc] sm:$0xf]
        %v333 = vld [vmem:[%s328 + $0x10] sm:$0xf]
        %v334 = vld [vmem:[%s328 + $0x14] sm:$0xf]
        %v335 = vld [vmem:[%s328 + $0x18] sm:$0xf]
        %v336 = vld [vmem:[%s328 + $0x1c] sm:$0xf]
        %v337 = vld [vmem:[%s328 + $0x20] sm:$0xf]
        %v338 = vld [vmem:[%s328 + $0x24] sm:$0xf]
        %v339 = vld [vmem:[%s328 + $0x28] sm:$0xf]
        %v340 = vld [vmem:[%s328 + $0x2c] sm:$0xf]
        %v341 = vld [vmem:[%s328 + $0x30] sm:$0xf]
        %v342 = vld [vmem:[%s328 + $0x34] sm:$0xf]
        %v343 = vld [vmem:[%s328 + $0x38] sm:$0xf]
        %v344 = vld [vmem:[%s328 + $0x3c] sm:$0xf]
        %v377 = vunpack.c.l.b16 %v294
        %v378 = vunpack.c.l.b16 %v295
        %v379 = vunpack.c.l.b16 %v296
        %v380 = vunpack.c.l.b16 %v297
        %v381 = vunpack.c.l.b16 %v298
        %v382 = vunpack.c.l.b16 %v299
        %v383 = vunpack.c.l.b16 %v300
        %v384 = vunpack.c.l.b16 %v301
        %v385 = vunpack.c.l.b16 %v302
        %v386 = vunpack.c.l.b16 %v303
        %v387 = vunpack.c.l.b16 %v304
        %v388 = vunpack.c.l.b16 %v305
        %v389 = vunpack.c.l.b16 %v306
        %v390 = vunpack.c.l.b16 %v307
        %v391 = vunpack.c.l.b16 %v308
        %v392 = vunpack.c.l.b16 %v309
        %v393 = vunpack.c.l.b16 %v310
        %v394 = vunpack.c.l.b16 %v311
        %v395 = vunpack.c.l.b16 %v312
        %v396 = vunpack.c.l.b16 %v313
        %v397 = vunpack.c.l.b16 %v314
        %v398 = vunpack.c.l.b16 %v315
        %v399 = vunpack.c.l.b16 %v316
        %v400 = vunpack.c.l.b16 %v317
        %v401 = vunpack.c.l.b16 %v318
        %v402 = vunpack.c.l.b16 %v319
        %v403 = vunpack.c.l.b16 %v320
        %v404 = vunpack.c.l.b16 %v321
        %v405 = vunpack.c.l.b16 %v322
        %v406 = vunpack.c.l.b16 %v323
        %v407 = vunpack.c.l.b16 %v324
        %v408 = vunpack.c.l.b16 %v325
        %v409 = vpack.c.b16 %v378, %v377
        %v410 = vpack.c.b16 %v380, %v379
        %v411 = vpack.c.b16 %v382, %v381
        %v412 = vpack.c.b16 %v384, %v383
        %v413 = vpack.c.b16 %v386, %v385
        %v414 = vpack.c.b16 %v388, %v387
        %v415 = vpack.c.b16 %v390, %v389
        %v416 = vpack.c.b16 %v392, %v391
        %v417 = vpack.c.b16 %v394, %v393
        %v418 = vpack.c.b16 %v396, %v395
        %v419 = vpack.c.b16 %v398, %v397
        %v420 = vpack.c.b16 %v400, %v399
        %v421 = vpack.c.b16 %v402, %v401
        %v422 = vpack.c.b16 %v404, %v403
        %v423 = vpack.c.b16 %v406, %v405
        %v424 = vpack.c.b16 %v408, %v407
        %v457 = vunpack.c.l.b16 %v329
        %v458 = vunpack.c.l.b16 %v330
        %v459 = vunpack.c.l.b16 %v331
        %v460 = vunpack.c.l.b16 %v332
        %v461 = vunpack.c.l.b16 %v333
        %v462 = vunpack.c.l.b16 %v334
        %v463 = vunpack.c.l.b16 %v335
        %v464 = vunpack.c.l.b16 %v336
        %v465 = vunpack.c.l.b16 %v337
        %v466 = vunpack.c.l.b16 %v338
        %v467 = vunpack.c.l.b16 %v339
        %v468 = vunpack.c.l.b16 %v340
        %v469 = vunpack.c.l.b16 %v341
        %v470 = vunpack.c.l.b16 %v342
        %v471 = vunpack.c.l.b16 %v343
        %v472 = vunpack.c.l.b16 %v344
        %v473 = vpack.c.b16 %v458, %v457
        %v474 = vpack.c.b16 %v460, %v459
        %v475 = vpack.c.b16 %v462, %v461
        %v476 = vpack.c.b16 %v464, %v463
        %v477 = vpack.c.b16 %v466, %v465
        %v478 = vpack.c.b16 %v468, %v467
        %v479 = vpack.c.b16 %v470, %v469
        %v480 = vpack.c.b16 %v472, %v471
        %489 = vmatpush.bf16.msra.mxu0 %v480
        %490 = vmatpush.bf16.msra.mxu0 %v479
        %491 = vmatpush.bf16.msra.mxu0 %v478
        %492 = vmatpush.bf16.msra.mxu0 %v477
        %493 = vmatpush.bf16.msra.mxu0 %v476
        %494 = vmatpush.bf16.msra.mxu0 %v475
        %495 = vmatpush.bf16.msra.mxu0 %v474
        %496 = vmatpush.bf16.msra.mxu0 %v473
        %497 = vmatmul.bf16.gmra.mxu0 %v409
        %v498 = vpop.f32.mrf.mxu0
        %v499 = vadd.f32 0.0, %v498
        %v500 = vpop.f32.mrf.mxu0
        %v501 = vadd.f32 0.0, %v500
        %502 = vmatmul.bf16.gmra.mxu0 %v410
        %v503 = vpop.f32.mrf.mxu0
        %v504 = vadd.f32 0.0, %v503
        %v505 = vpop.f32.mrf.mxu0
        %v506 = vadd.f32 0.0, %v505
        %507 = vmatmul.bf16.gmra.mxu0 %v411
        %v508 = vpop.f32.mrf.mxu0
        %v509 = vadd.f32 0.0, %v508
        %v510 = vpop.f32.mrf.mxu0
        %v511 = vadd.f32 0.0, %v510
        %512 = vmatmul.bf16.gmra.mxu0 %v412
        %v513 = vpop.f32.mrf.mxu0
        %v514 = vadd.f32 0.0, %v513
        %v515 = vpop.f32.mrf.mxu0
        %v516 = vadd.f32 0.0, %v515
        %517 = vmatmul.bf16.gmra.mxu0 %v413
        %v518 = vpop.f32.mrf.mxu0
        %v519 = vadd.f32 0.0, %v518
        %v520 = vpop.f32.mrf.mxu0
        %v521 = vadd.f32 0.0, %v520
        %522 = vmatmul.bf16.gmra.mxu0 %v414
        %v523 = vpop.f32.mrf.mxu0
        %v524 = vadd.f32 0.0, %v523
        %v525 = vpop.f32.mrf.mxu0
        %v526 = vadd.f32 0.0, %v525
        %527 = vmatmul.bf16.gmra.mxu0 %v415
        %v528 = vpop.f32.mrf.mxu0
        %v529 = vadd.f32 0.0, %v528
        %v530 = vpop.f32.mrf.mxu0
        %v531 = vadd.f32 0.0, %v530
        %532 = vmatmul.bf16.gmra.mxu0 %v416
        %v533 = vpop.f32.mrf.mxu0
        %v534 = vadd.f32 0.0, %v533
        %v535 = vpop.f32.mrf.mxu0
        %v536 = vadd.f32 0.0, %v535
        %537 = vmatmul.bf16.gmra.mxu0 %v417
        %v538 = vpop.f32.mrf.mxu0
        %v539 = vadd.f32 0.0, %v538
        %v540 = vpop.f32.mrf.mxu0
        %v541 = vadd.f32 0.0, %v540
        %542 = vmatmul.bf16.gmra.mxu0 %v418
        %v543 = vpop.f32.mrf.mxu0
        %v544 = vadd.f32 0.0, %v543
        %v545 = vpop.f32.mrf.mxu0
        %v546 = vadd.f32 0.0, %v545
        %547 = vmatmul.bf16.gmra.mxu0 %v419
        %v548 = vpop.f32.mrf.mxu0
        %v549 = vadd.f32 0.0, %v548
        %v550 = vpop.f32.mrf.mxu0
        %v551 = vadd.f32 0.0, %v550
        %552 = vmatmul.bf16.gmra.mxu0 %v420
        %v553 = vpop.f32.mrf.mxu0
        %v554 = vadd.f32 0.0, %v553
        %v555 = vpop.f32.mrf.mxu0
        %v556 = vadd.f32 0.0, %v555
        %557 = vmatmul.bf16.gmra.mxu0 %v421
        %v558 = vpop.f32.mrf.mxu0
        %v559 = vadd.f32 0.0, %v558
        %v560 = vpop.f32.mrf.mxu0
        %v561 = vadd.f32 0.0, %v560
        %562 = vmatmul.bf16.gmra.mxu0 %v422
        %v563 = vpop.f32.mrf.mxu0
        %v564 = vadd.f32 0.0, %v563
        %v565 = vpop.f32.mrf.mxu0
        %v566 = vadd.f32 0.0, %v565
        %567 = vmatmul.bf16.gmra.mxu0 %v423
        %v568 = vpop.f32.mrf.mxu0
        %v569 = vadd.f32 0.0, %v568
        %v570 = vpop.f32.mrf.mxu0
        %v571 = vadd.f32 0.0, %v570
        %572 = vmatmul.bf16.gmra.mxu0 %v424
        %v573 = vpop.f32.mrf.mxu0
        %v574 = vadd.f32 0.0, %v573
        %v575 = vpop.f32.mrf.mxu0
        %v576 = vadd.f32 0.0, %v575
        %577 = vdwg.mxu0
        %v578 = vadd.f32 %v262, %v499
        %v579 = vadd.f32 %v263, %v501
        %v580 = vadd.f32 %v264, %v504
        %v581 = vadd.f32 %v265, %v506
        %v582 = vadd.f32 %v266, %v509
        %v583 = vadd.f32 %v267, %v511
        %v584 = vadd.f32 %v268, %v514
        %v585 = vadd.f32 %v269, %v516
        %v586 = vadd.f32 %v270, %v519
        %v587 = vadd.f32 %v271, %v521
        %v588 = vadd.f32 %v272, %v524
        %v589 = vadd.f32 %v273, %v526
        %v590 = vadd.f32 %v274, %v529
        %v591 = vadd.f32 %v275, %v531
        %v592 = vadd.f32 %v276, %v534
        %v593 = vadd.f32 %v277, %v536
        %v594 = vadd.f32 %v278, %v539
        %v595 = vadd.f32 %v279, %v541
        %v596 = vadd.f32 %v280, %v544
        %v597 = vadd.f32 %v281, %v546
        %v598 = vadd.f32 %v282, %v549
        %v599 = vadd.f32 %v283, %v551
        %v600 = vadd.f32 %v284, %v554
        %v601 = vadd.f32 %v285, %v556
        %v602 = vadd.f32 %v286, %v559
        %v603 = vadd.f32 %v287, %v561
        %v604 = vadd.f32 %v288, %v564
        %v605 = vadd.f32 %v289, %v566
        %v606 = vadd.f32 %v290, %v569
        %v607 = vadd.f32 %v291, %v571
        %v608 = vadd.f32 %v292, %v574
        %v609 = vadd.f32 %v293, %v576
        %610 = vst [vmem:[%s223] sm:$0xff] %v578
        %611 = vst [vmem:[%s223 + $0x8] sm:$0xff] %v579
        %612 = vst [vmem:[%s223 + $0x10] sm:$0xff] %v580
        %613 = vst [vmem:[%s223 + $0x18] sm:$0xff] %v581
        %614 = vst [vmem:[%s223 + $0x20] sm:$0xff] %v582
        %615 = vst [vmem:[%s223 + $0x28] sm:$0xff] %v583
        %616 = vst [vmem:[%s223 + $0x30] sm:$0xff] %v584
        %617 = vst [vmem:[%s223 + $0x38] sm:$0xff] %v585
        %618 = vst [vmem:[%s223 + $0x40] sm:$0xff] %v586
        %619 = vst [vmem:[%s223 + $0x48] sm:$0xff] %v587
        %620 = vst [vmem:[%s223 + $0x50] sm:$0xff] %v588
        %621 = vst [vmem:[%s223 + $0x58] sm:$0xff] %v589
        %622 = vst [vmem:[%s223 + $0x60] sm:$0xff] %v590
        %623 = vst [vmem:[%s223 + $0x68] sm:$0xff] %v591
        %624 = vst [vmem:[%s223 + $0x70] sm:$0xff] %v592
        %625 = vst [vmem:[%s223 + $0x78] sm:$0xff] %v593
        %626 = vst [vmem:[%s223 + $0x80] sm:$0xff] %v594
        %627 = vst [vmem:[%s223 + $0x88] sm:$0xff] %v595
        %628 = vst [vmem:[%s223 + $0x90] sm:$0xff] %v596
        %629 = vst [vmem:[%s223 + $0x98] sm:$0xff] %v597
        %630 = vst [vmem:[%s223 + $0xa0] sm:$0xff] %v598
        %631 = vst [vmem:[%s223 + $0xa8] sm:$0xff] %v599
        %632 = vst [vmem:[%s223 + $0xb0] sm:$0xff] %v600
        %633 = vst [vmem:[%s223 + $0xb8] sm:$0xff] %v601
        %634 = vst [vmem:[%s223 + $0xc0] sm:$0xff] %v602
        %635 = vst [vmem:[%s223 + $0xc8] sm:$0xff] %v603
        %636 = vst [vmem:[%s223 + $0xd0] sm:$0xff] %v604
        %637 = vst [vmem:[%s223 + $0xd8] sm:$0xff] %v605
        %638 = vst [vmem:[%s223 + $0xe0] sm:$0xff] %v606
        %639 = vst [vmem:[%s223 + $0xe8] sm:$0xff] %v607
        %640 = vst [vmem:[%s223 + $0xf0] sm:$0xff] %v608
        %641 = vst [vmem:[%s223 + $0xf8] sm:$0xff] %v609
        %p642 = scmp.eq.s32.totalorder %s26, 1
        // Predicated region
        $region45: #{tpu_custom_call.1} parent=31 // pred_check
          %p643 = pneg %p642
        $region46: #{tpu_custom_call.1} parent=31 // pred_check_branch
          %645 = sbr.rel (%p643) target = $region48
        $region47: #{tpu_custom_call.1} parent=31 // pred_region
          %v646 = vld [vmem:[%s223] sm:$0xff]
          %v647 = vld [vmem:[%s223 + $0x8] sm:$0xff]
          %v648 = vld [vmem:[%s223 + $0x10] sm:$0xff]
          %v649 = vld [vmem:[%s223 + $0x18] sm:$0xff]
          %v650 = vld [vmem:[%s223 + $0x20] sm:$0xff]
          %v651 = vld [vmem:[%s223 + $0x28] sm:$0xff]
          %v652 = vld [vmem:[%s223 + $0x30] sm:$0xff]
          %v653 = vld [vmem:[%s223 + $0x38] sm:$0xff]
          %v654 = vld [vmem:[%s223 + $0x40] sm:$0xff]
          %v655 = vld [vmem:[%s223 + $0x48] sm:$0xff]
          %v656 = vld [vmem:[%s223 + $0x50] sm:$0xff]
          %v657 = vld [vmem:[%s223 + $0x58] sm:$0xff]
          %v658 = vld [vmem:[%s223 + $0x60] sm:$0xff]
          %v659 = vld [vmem:[%s223 + $0x68] sm:$0xff]
          %v660 = vld [vmem:[%s223 + $0x70] sm:$0xff]
          %v661 = vld [vmem:[%s223 + $0x78] sm:$0xff]
          %v662 = vld [vmem:[%s223 + $0x80] sm:$0xff]
          %v663 = vld [vmem:[%s223 + $0x88] sm:$0xff]
          %v664 = vld [vmem:[%s223 + $0x90] sm:$0xff]
          %v665 = vld [vmem:[%s223 + $0x98] sm:$0xff]
          %v666 = vld [vmem:[%s223 + $0xa0] sm:$0xff]
          %v667 = vld [vmem:[%s223 + $0xa8] sm:$0xff]
          %v668 = vld [vmem:[%s223 + $0xb0] sm:$0xff]
          %v669 = vld [vmem:[%s223 + $0xb8] sm:$0xff]
          %v670 = vld [vmem:[%s223 + $0xc0] sm:$0xff]
          %v671 = vld [vmem:[%s223 + $0xc8] sm:$0xff]
          %v672 = vld [vmem:[%s223 + $0xd0] sm:$0xff]
          %v673 = vld [vmem:[%s223 + $0xd8] sm:$0xff]
          %v674 = vld [vmem:[%s223 + $0xe0] sm:$0xff]
          %v675 = vld [vmem:[%s223 + $0xe8] sm:$0xff]
          %v676 = vld [vmem:[%s223 + $0xf0] sm:$0xff]
          %v677 = vld [vmem:[%s223 + $0xf8] sm:$0xff]
          %v678 = vld [vmem:[%s2] sm:$0x1]
          %v680 = vperm.slane %v678, 0
          %v682 = vadd.f32 %v646, %v680
          %v683 = vadd.f32 %v647, %v680
          %v684 = vadd.f32 %v648, %v680
          %v685 = vadd.f32 %v649, %v680
          %v686 = vadd.f32 %v650, %v680
          %v687 = vadd.f32 %v651, %v680
          %v688 = vadd.f32 %v652, %v680
          %v689 = vadd.f32 %v653, %v680
          %v690 = vadd.f32 %v654, %v680
          %v691 = vadd.f32 %v655, %v680
          %v692 = vadd.f32 %v656, %v680
          %v693 = vadd.f32 %v657, %v680
          %v694 = vadd.f32 %v658, %v680
          %v695 = vadd.f32 %v659, %v680
          %v696 = vadd.f32 %v660, %v680
          %v697 = vadd.f32 %v661, %v680
          %v698 = vadd.f32 %v662, %v680
          %v699 = vadd.f32 %v663, %v680
          %v700 = vadd.f32 %v664, %v680
          %v701 = vadd.f32 %v665, %v680
          %v702 = vadd.f32 %v666, %v680
          %v703 = vadd.f32 %v667, %v680
          %v704 = vadd.f32 %v668, %v680
          %v705 = vadd.f32 %v669, %v680
          %v706 = vadd.f32 %v670, %v680
          %v707 = vadd.f32 %v671, %v680
          %v708 = vadd.f32 %v672, %v680
          %v709 = vadd.f32 %v673, %v680
          %v710 = vadd.f32 %v674, %v680
          %v711 = vadd.f32 %v675, %v680
          %v712 = vadd.f32 %v676, %v680
          %v713 = vadd.f32 %v677, %v680
          %714 = vst [vmem:[%s223] sm:$0xff] %v682
          %715 = vst [vmem:[%s223 + $0x8] sm:$0xff] %v683
          %716 = vst [vmem:[%s223 + $0x10] sm:$0xff] %v684
          %717 = vst [vmem:[%s223 + $0x18] sm:$0xff] %v685
          %718 = vst [vmem:[%s223 + $0x20] sm:$0xff] %v686
          %719 = vst [vmem:[%s223 + $0x28] sm:$0xff] %v687
          %720 = vst [vmem:[%s223 + $0x30] sm:$0xff] %v688
          %721 = vst [vmem:[%s223 + $0x38] sm:$0xff] %v689
          %722 = vst [vmem:[%s223 + $0x40] sm:$0xff] %v690
          %723 = vst [vmem:[%s223 + $0x48] sm:$0xff] %v691
          %724 = vst [vmem:[%s223 + $0x50] sm:$0xff] %v692
          %725 = vst [vmem:[%s223 + $0x58] sm:$0xff] %v693
          %726 = vst [vmem:[%s223 + $0x60] sm:$0xff] %v694
          %727 = vst [vmem:[%s223 + $0x68] sm:$0xff] %v695
          %728 = vst [vmem:[%s223 + $0x70] sm:$0xff] %v696
          %729 = vst [vmem:[%s223 + $0x78] sm:$0xff] %v697
          %730 = vst [vmem:[%s223 + $0x80] sm:$0xff] %v698
          %731 = vst [vmem:[%s223 + $0x88] sm:$0xff] %v699
          %732 = vst [vmem:[%s223 + $0x90] sm:$0xff] %v700
          %733 = vst [vmem:[%s223 + $0x98] sm:$0xff] %v701
          %734 = vst [vmem:[%s223 + $0xa0] sm:$0xff] %v702
          %735 = vst [vmem:[%s223 + $0xa8] sm:$0xff] %v703
          %736 = vst [vmem:[%s223 + $0xb0] sm:$0xff] %v704
          %737 = vst [vmem:[%s223 + $0xb8] sm:$0xff] %v705
          %738 = vst [vmem:[%s223 + $0xc0] sm:$0xff] %v706
          %739 = vst [vmem:[%s223 + $0xc8] sm:$0xff] %v707
          %740 = vst [vmem:[%s223 + $0xd0] sm:$0xff] %v708
          %741 = vst [vmem:[%s223 + $0xd8] sm:$0xff] %v709
          %742 = vst [vmem:[%s223 + $0xe0] sm:$0xff] %v710
          %743 = vst [vmem:[%s223 + $0xe8] sm:$0xff] %v711
          %744 = vst [vmem:[%s223 + $0xf0] sm:$0xff] %v712
          %745 = vst [vmem:[%s223 + $0xf8] sm:$0xff] %v713
        $region48: #{tpu_custom_call.1} parent=31 // pred_fallthru
          _
        %s746 = sand.u32 %s111, 1
        %s747 = scalar_lea.sflag [#allocation4], %s746
        %s748 = sand.u32 %s111, 1
        %s749 = smul.addr %s748, 256
        %s750 = scalar_lea.vmem [#allocation7], %s749
        // Predicated region
        $region49: #{tpu_custom_call.1} parent=31 // pred_check
          %p751 = pneg %p121
        $region50: #{tpu_custom_call.1} parent=31 // pred_check_branch
          %753 = sbr.rel (%p751) target = $region52
        $region51: #{tpu_custom_call.1} parent=31 // pred_region
          %s754 = smul.u32 32, %s25
          %756 = vsyncadd %s747, 0
          %s757 = smul.addr %s754, 8
          %s758 = scalar_lea.hbm %s3, %s757
          %s759 = sshll.u32 %s750, 4
          %s760 = int_to_ptr.vmem [resolvable:$true] %s759
          %s761 = sshll.u32 %s758, 4
          %s762 = int_to_ptr.hbm [resolvable:$true] %s761
          %767 = dma.vmem_to_hbm [thread:$0]  %s760, 4096, %s762, %s747, 128, 128, 8
        $region52: #{tpu_custom_call.1} parent=31 // pred_fallthru
          _
      $region32: #{tpu_custom_call.1} parent=5 // pred_fallthru
        _
      %p768 = scmp.le.s32.totalorder 2, %s16
      // Predicated region
      $region53: #{tpu_custom_call.1} parent=5 // pred_check
        %p769 = pneg %p768
      $region54: #{tpu_custom_call.1} parent=5 // pred_check_branch
        %771 = sbr.rel (%p769) target = $region56
      $region55: #{tpu_custom_call.1} parent=5 // pred_region
        %s772 = ssub.s32 %s16, 2
        // Predicated region
        $region57: #{tpu_custom_call.1} parent=55 // pred_check
          %p773 = pneg %p127
        $region58: #{tpu_custom_call.1} parent=55 // pred_check_branch
          %775 = sbr.rel (%p773) target = $region60
        $region59: #{tpu_custom_call.1} parent=55 // pred_region
          %s776 = sand.u32 %s112, 1
          %s777 = scalar_lea.sflag [#allocation4], %s776
          %s778 = sand.u32 %s112, 1
          %s779 = smul.addr %s778, 256
          %s780 = scalar_lea.vmem [#allocation7], %s779
          %782 = dma.done %s777, 4096
        $region60: #{tpu_custom_call.1} parent=55 // pred_fallthru
          _
      $region56: #{tpu_custom_call.1} parent=5 // pred_fallthru
        _
    $region6: #{tpu_custom_call.1} parent=1 // loop_footer
      %s20 = sadd.s32 1, %s16
    $region7: #{tpu_custom_call.1} parent=1 // loop_footer_branch
      %15 = sbr.rel target = $region3
    $region8: #{tpu_custom_call.1} parent=1 // loop_exit
      _
    %783 = vsyncpa [#allocation3], 1
    %s784 = scalar_lea.sflag [#allocation3], 1
    %785 = vsyncpa %s784, 1
    %786 = vsyncpa [#allocation6], 1
    %787 = vsyncpa [#allocation4], 1
    %s788 = scalar_lea.sflag [#allocation4], 1
    %789 = vsyncpa %s788, 1

</llo_original>
